<compile_context>
chip_gen: v7x
topology: tpu7x:2x2x1
jax: 0.10.0
libtpu: 0.0.40
codegen_flags: <defaults>
</compile_context>

<pallas_src>
import numpy as np
import jax
import jax.numpy as jnp
from jax.experimental import pallas as pl
from jax.experimental.pallas import tpu as pltpu

N_CH_IN = 4
N_CH_OUT = 4
L_IN = 50                        # conv1: (50 - 5)//3 + 1 = 16 -> 8*16 = 128 = fc1.in_features
T1 = (L_IN - 5) // 3 + 1         # 16
L_OUT = (T1 - 1) * 3 + 5         # 50
C_HID = 8
K_IN = N_CH_IN * L_IN            # 200
N_MID = C_HID * T1               # 128
N_OUT = N_CH_OUT * L_OUT         # 200
BN_EPS = 1e-5
MAX_TILE_B = 2048                # fits comfortably in v7x's 64 MiB VMEM with double buffering
VMEM_LIMIT_BYTES = 40 * 1024 * 1024


# ------------------------------- kernels -------------------------------

def conv_stats_kernel(x_ref, m1_ref, z_ref, part_ref):
    """Pass 1 (batch-parallel): conv matmul per batch tile; emit bf16 z for pass 2 and this
    tile's column sums / sums-of-squares (for BN batch statistics)."""
    xb = x_ref[...].astype(jnp.bfloat16)
    # Conv1d as matmul.  Conv bias is intentionally omitted: training-mode BN subtracts the
    # per-channel batch mean, which cancels a per-channel constant exactly.
    z = jnp.dot(xb, m1_ref[...], preferred_element_type=jnp.float32)   # (TB, 128) f32
    z_ref[...] = z.astype(jnp.bfloat16)
    part_ref[0:1, :] = jnp.sum(z, axis=0, keepdims=True)               # column sums
    part_ref[1:2, :] = jnp.sum(z * z, axis=0, keepdims=True)           # column sums of squares


def apply_kernel(z_ref, ss_ref, w1t_ref, w2t_ref, m2_ref, bias_ref, out_ref):
    """Pass 2 (batch-parallel): BN(scale/shift)+ReLU -> fc1+ReLU -> fc2+ReLU -> tconv -> sigmoid."""
    bf16 = jnp.bfloat16
    f32 = jnp.float32

    z = z_ref[...].astype(f32)                                          # conv activation from pass 1
    z = jnp.maximum(z * ss_ref[0:1, :] + ss_ref[1:2, :], 0.0)           # BN + ReLU (f32 VPU)

    y = jnp.dot(z.astype(bf16), w1t_ref[...], preferred_element_type=f32)
    y = jnp.maximum(y + bias_ref[0:1, 0:32], 0.0)                       # fc1 + ReLU

    y = jnp.dot(y.astype(bf16), w2t_ref[...], preferred_element_type=f32)
    y = jnp.maximum(y + bias_ref[1:2, 0:N_MID], 0.0)                    # fc2 + ReLU

    o = jnp.dot(y.astype(bf16), m2_ref[...], preferred_element_type=f32)
    o = o + bias_ref[2:3, :]                                            # tconv bias (per column)
    out_ref[...] = 0.5 * (jnp.tanh(0.5 * o) + 1.0)                      # sigmoid via EUP tanh


# ------------------------- one-time parameter prep -------------------------

def build_conv_matrix(w1):
    # w1: (8, C_in, 5).  M1[ci*L_IN + 3t + k, co*T1 + t] = w1[co, ci, k]
    m1 = np.zeros((K_IN, N_MID), np.float32)
    for co in range(C_HID):
        for ci in range(N_CH_IN):
            for t in range(T1):
                for k in range(5):
                    m1[ci * L_IN + 3 * t + k, co * T1 + t] = w1[co, ci, k]
    return m1


def build_tconv_matrix(wt):
    # wt: (8, C_out, 5).  M2[ci*T1 + t, co*L_OUT + 3t + k] += wt[ci, co, k]
    # Columns 0..199 are exactly the flattened (C_out, L_OUT) output layout (no padding), so the
    # wrapper's final reshape to (B, 4, 50) is a free bitcast.
    m2 = np.zeros((N_MID, N_OUT), np.float32)
    for ci in range(C_HID):
        for co in range(N_CH_OUT):
            for t in range(T1):
                for k in range(5):
                    m2[ci * T1 + t, co * L_OUT + 3 * t + k] += wt[ci, co, k]
    return m2


def prepare_params(params):
    """Hoisted host-side prep (run once): dense matmul weights (bf16) + packed f32 bias slab."""
    p = {k: np.asarray(v, np.float32) for k, v in params.items()}

    bias = np.zeros((3, N_OUT), np.float32)          # packed fc1 / fc2 / tconv biases
    bias[0, :32] = p["bfc1"]
    bias[1, :N_MID] = p["bfc2"]
    bias[2, :] = np.repeat(p["bt"], L_OUT)

    # Conv bias b1 is NOT used: training-mode BN cancels it exactly.
    return dict(
        m1=jnp.asarray(build_conv_matrix(p["w1"]), jnp.bfloat16),        # (200, 128)
        m2=jnp.asarray(build_tconv_matrix(p["wt"]), jnp.bfloat16),       # (128, 200)
        w1t=jnp.asarray(np.ascontiguousarray(p["wfc1"].T), jnp.bfloat16),  # (128, 32)
        w2t=jnp.asarray(np.ascontiguousarray(p["wfc2"].T), jnp.bfloat16),  # (32, 128)
        gamma=jnp.asarray(p["gamma"]),                                    # (8,)
        beta=jnp.asarray(p["beta"]),                                      # (8,)
        bias=jnp.asarray(bias),                                           # (3, 200)
    )


def init_params(key):
    ks = jax.random.split(key, 8)

    def u(k, shape, fan_in):
        bound = 1.0 / np.sqrt(fan_in)
        return jax.random.uniform(k, shape, jnp.float32, -bound, bound)

    return dict(
        w1=u(ks[0], (C_HID, N_CH_IN, 5), N_CH_IN * 5),
        b1=u(ks[1], (C_HID,), N_CH_IN * 5),
        gamma=1.0 + 0.1 * jax.random.normal(ks[2], (C_HID,), jnp.float32),
        beta=0.1 * jax.random.normal(ks[3], (C_HID,), jnp.float32),
        wfc1=u(ks[4], (32, 128), 128),
        bfc1=u(ks[4], (32,), 128),
        wfc2=u(ks[5], (128, 32), 32),
        bfc2=u(ks[5], (128,), 32),
        wt=u(ks[6], (C_HID, N_CH_OUT, 5), C_HID * 5),
        bt=u(ks[7], (N_CH_OUT,), C_HID * 5),
    )


# ------------------------------- forward -------------------------------

def _round_up(v, m):
    return (v + m - 1) // m * m


def hourglass_forward(x, prepped):
    B = x.shape[0]
    xflat = jnp.reshape(x.astype(jnp.float32), (B, K_IN))

    # Batch tiling: minimal 8-row-aligned padding; >=2 tiles when the batch is big enough so the
    # "parallel" grid axis can shard across both v7x TensorCores (harmless on v5e/v6e).
    b8 = _round_up(B, 8)
    n_tiles = max(1, -(-b8 // MAX_TILE_B))
    if b8 >= 32:
        n_tiles = max(n_tiles, 2)
    tile_b = _round_up(-(-b8 // n_tiles), 8)
    b_pad = tile_b * n_tiles
    if b_pad != B:
        # Zero rows contribute nothing to the BN sums; inv_n uses the true batch size.
        xflat = jnp.pad(xflat, ((0, b_pad - B), (0, 0)))
    grid = (n_tiles,)
    inv_n = 1.0 / float(B * T1)

    cparams = pltpu.CompilerParams(
        dimension_semantics=("parallel",),
        vmem_limit_bytes=VMEM_LIMIT_BYTES)

    def res(shape):   # resident (un-tiled) operand: same block for every grid step
        return pl.BlockSpec(shape, lambda i, _n=len(shape): (0,) * _n)

    # ---- pass 1: conv matmul, bf16 z writeout, per-tile BN partial sums ----
    z_bf16, partials = pl.pallas_call(
        conv_stats_kernel,
        out_shape=(jax.ShapeDtypeStruct((b_pad, N_MID), jnp.bfloat16),
                   jax.ShapeDtypeStruct((n_tiles, 2, N_MID), jnp.float32)),
        grid_spec=pltpu.PrefetchScalarGridSpec(
            num_scalar_prefetch=0,
            grid=grid,
            in_specs=[pl.BlockSpec((tile_b, K_IN), lambda i: (i, 0)),
                      res((K_IN, N_MID))],
            out_specs=[pl.BlockSpec((tile_b, N_MID), lambda i: (i, 0)),
                       pl.BlockSpec((None, 2, N_MID), lambda i: (i, 0, 0))],
        ),
        compiler_params=cparams,
    )(xflat, prepped["m1"])

    # ---- tiny finalize in the wrapper: (n_tiles,2,128) -> per-column BN scale/shift (2,128) ----
    sums = jnp.sum(partials, axis=0)                                   # (2, 128)
    ch = jnp.sum(sums.reshape(2, C_HID, T1), axis=-1) * inv_n          # (2, 8): [mean, E[z^2]]
    mean_ch = ch[0]
    var_ch = jnp.maximum(ch[1] - mean_ch * mean_ch, 0.0)               # clamp cancellation
    inv_std = jax.lax.rsqrt(var_ch + BN_EPS)
    scale_ch = prepped["gamma"] * inv_std
    shift_ch = prepped["beta"] - mean_ch * scale_ch
    ss = jnp.stack([jnp.repeat(scale_ch, T1), jnp.repeat(shift_ch, T1)], axis=0)  # (2, 128) f32

    # ---- pass 2: BN + fc1 + fc2 + tconv + sigmoid, batch-parallel ----
    out_flat = pl.pallas_call(
        apply_kernel,
        out_shape=jax.ShapeDtypeStruct((b_pad, N_OUT), jnp.float32),
        grid_spec=pltpu.PrefetchScalarGridSpec(
            num_scalar_prefetch=0,
            grid=grid,
            in_specs=[pl.BlockSpec((tile_b, N_MID), lambda i: (i, 0)),
                      res((2, N_MID)),
                      res((N_MID, 32)),
                      res((32, N_MID)),
                      res((N_MID, N_OUT)),
                      res((3, N_OUT))],
            out_specs=pl.BlockSpec((tile_b, N_OUT), lambda i: (i, 0)),
        ),
        compiler_params=cparams,
    )(z_bf16, ss, prepped["w1t"], prepped["w2t"], prepped["m2"], prepped["bias"])

    out = out_flat if b_pad == B else out_flat[:B]
    return jnp.reshape(out, (B, N_CH_OUT, L_OUT))      # free bitcast (pure last-dim split)


# ---------- pure-numpy reference (direct transcription of the PyTorch forward) ----------

def numpy_reference(x, p):
    B = x.shape[0]
    z = np.zeros((B, C_HID, T1), np.float32)
    for b in range(B):
        for co in range(C_HID):
            for t in range(T1):
                z[b, co, t] = np.sum(p["w1"][co] * x[b, :, 3 * t:3 * t + 5]) + p["b1"][co]
    mean = z.mean(axis=(0, 2))
    var = z.var(axis=(0, 2))                                  # biased, training-mode BN
    z = (z - mean[None, :, None]) / np.sqrt(var[None, :, None] + BN_EPS)
    z = z * p["gamma"][None, :, None] + p["beta"][None, :, None]
    z = np.maximum(z, 0.0)
    flat = z.reshape(B, -1)
    y1 = np.maximum(flat @ p["wfc1"].T + p["bfc1"], 0.0)
    y2 = np.maximum(y1 @ p["wfc2"].T + p["bfc2"], 0.0)
    h = y2.reshape(B, C_HID, T1)
    out = np.zeros((B, N_CH_OUT, L_OUT), np.float32)
    for b in range(B):
        for ci in range(C_HID):
            for co in range(N_CH_OUT):
                for t in range(T1):
                    out[b, co, 3 * t:3 * t + 5] += h[b, ci, t] * p["wt"][ci, co]
    out += p["bt"][None, :, None]
    return 1.0 / (1.0 + np.exp(-out))


if __name__ == "__main__":
    key = jax.random.PRNGKey(0)
    pkey, xkey = jax.random.split(key)
    params = init_params(pkey)
    x = jax.random.normal(xkey, (2, N_CH_IN, L_IN), jnp.float32)

    prepped = prepare_params(params)          # one-time host-side prep (hoisted out of forward)
    fwd = jax.jit(hourglass_forward)
    out = jax.block_until_ready(fwd(x, prepped))

    ref = numpy_reference(np.asarray(x), {k: np.asarray(v, np.float32) for k, v in params.items()})
    assert out.shape == (2, N_CH_OUT, L_OUT)
    # Tolerance admits bf16 MXU operands and bf16 storage of the intermediate conv activation
    # (f32 accumulate / f32 BN stats / f32 output).
    np.testing.assert_allclose(np.asarray(out), ref, atol=1e-2, rtol=1e-2)
    print("KERNEL_OK")
</pallas_src>

<mosaic_0001>
module attributes {stable_mosaic.version = 11 : i64} {
  func.func @conv_stats_kernel(%arg0: i32, %arg1: memref<8x200xf32, #tpu.memory_space<vmem>>, %arg2: memref<200x128xbf16, #tpu.memory_space<vmem>>, %arg3: memref<8x128xbf16, #tpu.memory_space<vmem>>, %arg4: memref<1x2x128xf32, #tpu.memory_space<vmem>>) attributes {dimension_semantics = [#tpu.dimension_semantics<parallel>], iteration_bounds = array<i64: 1>, scalar_prefetch = 0 : i64, scratch_operands = 0 : i64, tpu.core_type = #tpu.core_type<tc>, window_params = [{transform_indices = @transform_0, window_bounds = array<i64: 8, 200>}, {pipeline_mode = #tpu.pipeline_mode<synchronous>, transform_indices = @transform_1, window_bounds = array<i64: 200, 128>}, {transform_indices = @transform_2, window_bounds = array<i64: 8, 128>}, {transform_indices = @transform_3, window_bounds = array<i64: 1, 2, 128>}]} {
    %c0 = arith.constant 0 : index
    %c0_0 = arith.constant 0 : index
    %0 = vector.load %arg1[%c0, %c0_0] : memref<8x200xf32, #tpu.memory_space<vmem>>, vector<8x200xf32>
    %1 = arith.truncf %0 : vector<8x200xf32> to vector<8x200xbf16>
    %c0_1 = arith.constant 0 : index
    %c0_2 = arith.constant 0 : index
    %2 = vector.load %arg2[%c0_1, %c0_2] : memref<200x128xbf16, #tpu.memory_space<vmem>>, vector<200x128xbf16>
    %cst = arith.constant dense<0.000000e+00> : vector<8x128xf32>
    %3 = tpu.matmul %1, %2, %cst {dimension_numbers = #tpu.dot_dimension_numbers<[1], [0], [0], [1], [0, 0, 1, 1], [], []>} : vector<8x200xbf16>, vector<200x128xbf16>, vector<8x128xf32> -> vector<8x128xf32>
    %4 = arith.truncf %3 : vector<8x128xf32> to vector<8x128xbf16>
    %c0_3 = arith.constant 0 : index
    %c0_4 = arith.constant 0 : index
    %5 = vector.load %arg3[%c0_3, %c0_4] : memref<8x128xbf16, #tpu.memory_space<vmem>>, vector<8x128xbf16>
    tpu.vector_store %arg3[%c0_3, %c0_4], %4 {strides = array<i32>} : memref<8x128xbf16, #tpu.memory_space<vmem>>, vector<8x128xbf16>,
    %cst_5 = arith.constant dense<0.000000e+00> : vector<128xf32>
    %6 = vector.multi_reduction <add>, %3, %cst_5 [0] : vector<8x128xf32> to vector<128xf32>
    %7 = vector.shape_cast %6 : vector<128xf32> to vector<1x128xf32>
    %c0_6 = arith.constant 0 : index
    %c0_7 = arith.constant 0 : index
    %c0_8 = arith.constant 0 : index
    %8 = vector.load %arg4[%c0_6, %c0_7, %c0_8] : memref<1x2x128xf32, #tpu.memory_space<vmem>>, vector<1x1x128xf32>
    %9 = vector.shape_cast %8 : vector<1x1x128xf32> to vector<1x128xf32>
    %10 = vector.shape_cast %7 : vector<1x128xf32> to vector<1x1x128xf32>
    tpu.vector_store %arg4[%c0_6, %c0_7, %c0_8], %10 {strides = array<i32>} : memref<1x2x128xf32, #tpu.memory_space<vmem>>, vector<1x1x128xf32>,
    %11 = arith.mulf %3, %3 : vector<8x128xf32>
    %cst_9 = arith.constant dense<0.000000e+00> : vector<128xf32>
    %12 = vector.multi_reduction <add>, %11, %cst_9 [0] : vector<8x128xf32> to vector<128xf32>
    %13 = vector.shape_cast %12 : vector<128xf32> to vector<1x128xf32>
    %c0_10 = arith.constant 0 : index
    %c1 = arith.constant 1 : index
    %c0_11 = arith.constant 0 : index
    %14 = vector.load %arg4[%c0_10, %c1, %c0_11] : memref<1x2x128xf32, #tpu.memory_space<vmem>>, vector<1x1x128xf32>
    %15 = vector.shape_cast %14 : vector<1x1x128xf32> to vector<1x128xf32>
    %16 = vector.shape_cast %13 : vector<1x128xf32> to vector<1x1x128xf32>
    tpu.vector_store %arg4[%c0_10, %c1, %c0_11], %16 {strides = array<i32>} : memref<1x2x128xf32, #tpu.memory_space<vmem>>, vector<1x1x128xf32>,
    return
  }
  func.func @transform_0(%arg0: i32) -> (i32, i32) {
    %c0_i32 = arith.constant 0 : i32
    %c0_i32_0 = arith.constant 0 : i32
    return %arg0, %c0_i32 : i32, i32
  }
  func.func @transform_1(%arg0: i32) -> (i32, i32) {
    %c0_i32 = arith.constant 0 : i32
    %c0_i32_0 = arith.constant 0 : i32
    %c0_i32_1 = arith.constant 0 : i32
    return %c0_i32, %c0_i32_0 : i32, i32
  }
  func.func @transform_2(%arg0: i32) -> (i32, i32) {
    %c0_i32 = arith.constant 0 : i32
    %c0_i32_0 = arith.constant 0 : i32
    return %arg0, %c0_i32 : i32, i32
  }
  func.func @transform_3(%arg0: i32) -> (i32, i32, i32) {
    %c0_i32 = arith.constant 0 : i32
    %c0_i32_0 = arith.constant 0 : i32
    %c0_i32_1 = arith.constant 0 : i32
    return %arg0, %c0_i32, %c0_i32_0 : i32, i32, i32
  }
}

module attributes {stable_mosaic.version = 11 : i64} {
  func.func @apply_kernel(%arg0: i32, %arg1: memref<8x128xbf16, #tpu.memory_space<vmem>>, %arg2: memref<2x128xf32, #tpu.memory_space<vmem>>, %arg3: memref<128x32xbf16, #tpu.memory_space<vmem>>, %arg4: memref<32x128xbf16, #tpu.memory_space<vmem>>, %arg5: memref<128x200xbf16, #tpu.memory_space<vmem>>, %arg6: memref<3x200xf32, #tpu.memory_space<vmem>>, %arg7: memref<8x200xf32, #tpu.memory_space<vmem>>) attributes {dimension_semantics = [#tpu.dimension_semantics<parallel>], iteration_bounds = array<i64: 1>, scalar_prefetch = 0 : i64, scratch_operands = 0 : i64, tpu.core_type = #tpu.core_type<tc>, window_params = [{transform_indices = @transform_0, window_bounds = array<i64: 8, 128>}, {pipeline_mode = #tpu.pipeline_mode<synchronous>, transform_indices = @transform_1, window_bounds = array<i64: 2, 128>}, {pipeline_mode = #tpu.pipeline_mode<synchronous>, transform_indices = @transform_2, window_bounds = array<i64: 128, 32>}, {pipeline_mode = #tpu.pipeline_mode<synchronous>, transform_indices = @transform_3, window_bounds = array<i64: 32, 128>}, {pipeline_mode = #tpu.pipeline_mode<synchronous>, transform_indices = @transform_4, window_bounds = array<i64: 128, 200>}, {pipeline_mode = #tpu.pipeline_mode<synchronous>, transform_indices = @transform_5, window_bounds = array<i64: 3, 200>}, {transform_indices = @transform_6, window_bounds = array<i64: 8, 200>}]} {
    %c0 = arith.constant 0 : index
    %c0_0 = arith.constant 0 : index
    %0 = vector.load %arg1[%c0, %c0_0] : memref<8x128xbf16, #tpu.memory_space<vmem>>, vector<8x128xbf16>
    %1 = arith.extf %0 : vector<8x128xbf16> to vector<8x128xf32>
    %c0_1 = arith.constant 0 : index
    %c0_2 = arith.constant 0 : index
    %2 = vector.load %arg2[%c0_1, %c0_2] : memref<2x128xf32, #tpu.memory_space<vmem>>, vector<1x128xf32>
    %3 = vector.broadcast %2 : vector<1x128xf32> to vector<8x128xf32>
    %4 = arith.mulf %1, %3 : vector<8x128xf32>
    %c1 = arith.constant 1 : index
    %c0_3 = arith.constant 0 : index
    %5 = vector.load %arg2[%c1, %c0_3] : memref<2x128xf32, #tpu.memory_space<vmem>>, vector<1x128xf32>
    %6 = vector.broadcast %5 : vector<1x128xf32> to vector<8x128xf32>
    %7 = arith.addf %4, %6 : vector<8x128xf32>
    %cst = arith.constant 0.000000e+00 : f32
    %8 = vector.broadcast %cst : f32 to vector<8x128xf32>
    %9 = arith.maximumf %7, %8 : vector<8x128xf32>
    %10 = arith.truncf %9 : vector<8x128xf32> to vector<8x128xbf16>
    %c0_4 = arith.constant 0 : index
    %c0_5 = arith.constant 0 : index
    %11 = vector.load %arg3[%c0_4, %c0_5] : memref<128x32xbf16, #tpu.memory_space<vmem>>, vector<128x32xbf16>
    %cst_6 = arith.constant dense<0.000000e+00> : vector<8x32xf32>
    %12 = tpu.matmul %10, %11, %cst_6 {dimension_numbers = #tpu.dot_dimension_numbers<[1], [0], [0], [1], [0, 0, 1, 1], [], []>} : vector<8x128xbf16>, vector<128x32xbf16>, vector<8x32xf32> -> vector<8x32xf32>
    %c0_7 = arith.constant 0 : index
    %c0_8 = arith.constant 0 : index
    %13 = vector.load %arg6[%c0_7, %c0_8] : memref<3x200xf32, #tpu.memory_space<vmem>>, vector<1x32xf32>
    %14 = vector.broadcast %13 : vector<1x32xf32> to vector<8x32xf32>
    %15 = arith.addf %12, %14 : vector<8x32xf32>
    %cst_9 = arith.constant 0.000000e+00 : f32
    %16 = vector.broadcast %cst_9 : f32 to vector<8x32xf32>
    %17 = arith.maximumf %15, %16 : vector<8x32xf32>
    %18 = arith.truncf %17 : vector<8x32xf32> to vector<8x32xbf16>
    %c0_10 = arith.constant 0 : index
    %c0_11 = arith.constant 0 : index
    %19 = vector.load %arg4[%c0_10, %c0_11] : memref<32x128xbf16, #tpu.memory_space<vmem>>, vector<32x128xbf16>
    %cst_12 = arith.constant dense<0.000000e+00> : vector<8x128xf32>
    %20 = tpu.matmul %18, %19, %cst_12 {dimension_numbers = #tpu.dot_dimension_numbers<[1], [0], [0], [1], [0, 0, 1, 1], [], []>} : vector<8x32xbf16>, vector<32x128xbf16>, vector<8x128xf32> -> vector<8x128xf32>
    %c1_13 = arith.constant 1 : index
    %c0_14 = arith.constant 0 : index
    %21 = vector.load %arg6[%c1_13, %c0_14] : memref<3x200xf32, #tpu.memory_space<vmem>>, vector<1x128xf32>
    %22 = vector.broadcast %21 : vector<1x128xf32> to vector<8x128xf32>
    %23 = arith.addf %20, %22 : vector<8x128xf32>
    %cst_15 = arith.constant 0.000000e+00 : f32
    %24 = vector.broadcast %cst_15 : f32 to vector<8x128xf32>
    %25 = arith.maximumf %23, %24 : vector<8x128xf32>
    %26 = arith.truncf %25 : vector<8x128xf32> to vector<8x128xbf16>
    %c0_16 = arith.constant 0 : index
    %c0_17 = arith.constant 0 : index
    %27 = vector.load %arg5[%c0_16, %c0_17] : memref<128x200xbf16, #tpu.memory_space<vmem>>, vector<128x200xbf16>
    %cst_18 = arith.constant dense<0.000000e+00> : vector<8x200xf32>
    %28 = tpu.matmul %26, %27, %cst_18 {dimension_numbers = #tpu.dot_dimension_numbers<[1], [0], [0], [1], [0, 0, 1, 1], [], []>} : vector<8x128xbf16>, vector<128x200xbf16>, vector<8x200xf32> -> vector<8x200xf32>
    %c2 = arith.constant 2 : index
    %c0_19 = arith.constant 0 : index
    %29 = vector.load %arg6[%c2, %c0_19] : memref<3x200xf32, #tpu.memory_space<vmem>>, vector<1x200xf32>
    %30 = vector.broadcast %29 : vector<1x200xf32> to vector<8x200xf32>
    %31 = arith.addf %28, %30 : vector<8x200xf32>
    %cst_20 = arith.constant 5.000000e-01 : f32
    %32 = vector.broadcast %cst_20 : f32 to vector<8x200xf32>
    %33 = arith.mulf %32, %31 : vector<8x200xf32>
    %34 = math.tanh %33 : vector<8x200xf32>
    %cst_21 = arith.constant 1.000000e+00 : f32
    %35 = vector.broadcast %cst_21 : f32 to vector<8x200xf32>
    %36 = arith.addf %34, %35 : vector<8x200xf32>
    %cst_22 = arith.constant 5.000000e-01 : f32
    %37 = vector.broadcast %cst_22 : f32 to vector<8x200xf32>
    %38 = arith.mulf %37, %36 : vector<8x200xf32>
    %c0_23 = arith.constant 0 : index
    %c0_24 = arith.constant 0 : index
    %39 = vector.load %arg7[%c0_23, %c0_24] : memref<8x200xf32, #tpu.memory_space<vmem>>, vector<8x200xf32>
    tpu.vector_store %arg7[%c0_23, %c0_24], %38 {strides = array<i32>} : memref<8x200xf32, #tpu.memory_space<vmem>>, vector<8x200xf32>,
    return
  }
  func.func @transform_0(%arg0: i32) -> (i32, i32) {
    %c0_i32 = arith.constant 0 : i32
    %c0_i32_0 = arith.constant 0 : i32
    return %arg0, %c0_i32 : i32, i32
  }
  func.func @transform_1(%arg0: i32) -> (i32, i32) {
    %c0_i32 = arith.constant 0 : i32
    %c0_i32_0 = arith.constant 0 : i32
    %c0_i32_1 = arith.constant 0 : i32
    return %c0_i32, %c0_i32_0 : i32, i32
  }
  func.func @transform_2(%arg0: i32) -> (i32, i32) {
    %c0_i32 = arith.constant 0 : i32
    %c0_i32_0 = arith.constant 0 : i32
    %c0_i32_1 = arith.constant 0 : i32
    return %c0_i32, %c0_i32_0 : i32, i32
  }
  func.func @transform_3(%arg0: i32) -> (i32, i32) {
    %c0_i32 = arith.constant 0 : i32
    %c0_i32_0 = arith.constant 0 : i32
    %c0_i32_1 = arith.constant 0 : i32
    return %c0_i32, %c0_i32_0 : i32, i32
  }
  func.func @transform_4(%arg0: i32) -> (i32, i32) {
    %c0_i32 = arith.constant 0 : i32
    %c0_i32_0 = arith.constant 0 : i32
    %c0_i32_1 = arith.constant 0 : i32
    return %c0_i32, %c0_i32_0 : i32, i32
  }
  func.func @transform_5(%arg0: i32) -> (i32, i32) {
    %c0_i32 = arith.constant 0 : i32
    %c0_i32_0 = arith.constant 0 : i32
    %c0_i32_1 = arith.constant 0 : i32
    return %c0_i32, %c0_i32_0 : i32, i32
  }
  func.func @transform_6(%arg0: i32) -> (i32, i32) {
    %c0_i32 = arith.constant 0 : i32
    %c0_i32_0 = arith.constant 0 : i32
    return %arg0, %c0_i32 : i32, i32
  }
}

</mosaic_0001>

<llo_original>
// kernel: hourglass_forward.2
$region0: #{hourglass_forward.2}
  #allocation0 [shape = 'u32[]', space=smem, size = 0x4, offset = 0x4, fixed_abs, tag = 'smem constant byte address 0x4 - core index']
  #allocation1 [shape = 'u32[144,128]{1,0:T(1,128)}', space=vmem, size = 0x12000, scoped, tag = 'internal scratch']
  %s0 = inlined_call_operand.vmem [shape: f32[8,200], index: 0, kind: input, shape index: {}]
  %s1 = inlined_call_operand.hbm [shape: bf16[200,128], index: 1, kind: input, shape index: {}]
  %s2 = inlined_call_operand.vmem [shape: bf16[8,128], index: 2, kind: output, shape index: {0}]
  %s3 = inlined_call_operand.vmem [shape: f32[1,2,128], index: 3, kind: output, shape index: {1}]
  %4 = xla_tuple %s2, %s3
  %s5 = sld [smem:[#allocation0]]
  $region30: #{hourglass_forward.2} parent=0
    _
  %s7 = ssub.s32 1, %s5
  %s8 = scalar_select 0, %s7, %s5
  $region1: #{hourglass_forward.2} parent=0
    #allocation2 [shape = 'u8[51200]{0}', space=vmem, size = 0xc800, scoped, tag = 'input window, operand 1, single buffered']
    #allocation3 [shape = 's32[1]{0}', space=sflag, size = 0x4, scoped, tag = 'scoped memory for hourglass_forward.2']
    %9 = vsyncpa [#allocation3], 0
    // Predicated region
    $region2: #{hourglass_forward.2} parent=1 // pred_check
      _
    $region3: #{hourglass_forward.2} parent=1 // pred_check_branch
      %11 = sbr.rel (0) target = $region5
    $region4: #{hourglass_forward.2} parent=1 // pred_region
      _
    $region5: #{hourglass_forward.2} parent=1 // pred_fallthru
      _
    // Predicated region
    $region6: #{hourglass_forward.2} parent=1 // pred_check
      _
    $region7: #{hourglass_forward.2} parent=1 // pred_check_branch
      %13 = sbr.rel (0) target = $region9
    $region8: #{hourglass_forward.2} parent=1 // pred_region
      %s15 = ssub.s32 1600, 1600
      %16 = vsyncadd [#allocation3], %s15
      %s17 = sshll.u32 [#allocation2], 4
      %s18 = int_to_ptr.vmem [resolvable:$true] %s17
      %23 = dma.hbm_to_vmem [thread:$0]  %s1, 1600, %s18, [#allocation3], 64, 64, 4
    $region9: #{hourglass_forward.2} parent=1 // pred_fallthru
      _
    // Predicated region
    $region10: #{hourglass_forward.2} parent=1 // pred_check
      _
    $region11: #{hourglass_forward.2} parent=1 // pred_check_branch
      %25 = sbr.rel (0) target = $region13
    $region12: #{hourglass_forward.2} parent=1 // pred_region
      %26 = dma.done [#allocation3], 1600
    $region13: #{hourglass_forward.2} parent=1 // pred_fallthru
      _
    %v28 = vld [vmem:[%s0] sm:$0xff]
    %v29 = vld [vmem:[%s0 + $0x8] sm:$0xff]
    %v30 = vpack.c.bf16 %v28, %v28
    %v31 = vpack.c.bf16 %v29, %v29
    %v32 = vld [vmem:[#allocation2] sm:$0xf]
    %v33 = vld [vmem:[#allocation2 + $0x4] sm:$0xf]
    %v34 = vld [vmem:[#allocation2 + $0x8] sm:$0xf]
    %v35 = vld [vmem:[#allocation2 + $0xc] sm:$0xf]
    %v36 = vld [vmem:[#allocation2 + $0x10] sm:$0xf]
    %v37 = vld [vmem:[#allocation2 + $0x14] sm:$0xf]
    %v38 = vld [vmem:[#allocation2 + $0x18] sm:$0xf]
    %v39 = vld [vmem:[#allocation2 + $0x1c] sm:$0xf]
    %v40 = vld [vmem:[#allocation2 + $0x20] sm:$0xf]
    %v41 = vld [vmem:[#allocation2 + $0x24] sm:$0xf]
    %v42 = vld [vmem:[#allocation2 + $0x28] sm:$0xf]
    %v43 = vld [vmem:[#allocation2 + $0x2c] sm:$0xf]
    %v44 = vld [vmem:[#allocation2 + $0x30] sm:$0xf]
    %v45 = vld [vmem:[#allocation2 + $0x34] sm:$0xf]
    %v46 = vld [vmem:[#allocation2 + $0x38] sm:$0xf]
    %v47 = vld [vmem:[#allocation2 + $0x3c] sm:$0xf]
    %v48 = vld [vmem:[#allocation2 + $0x40] sm:$0xf]
    %v49 = vld [vmem:[#allocation2 + $0x44] sm:$0xf]
    %v50 = vld [vmem:[#allocation2 + $0x48] sm:$0xf]
    %v51 = vld [vmem:[#allocation2 + $0x4c] sm:$0xf]
    %v52 = vld [vmem:[#allocation2 + $0x50] sm:$0xf]
    %v53 = vld [vmem:[#allocation2 + $0x54] sm:$0xf]
    %v54 = vld [vmem:[#allocation2 + $0x58] sm:$0xf]
    %v55 = vld [vmem:[#allocation2 + $0x5c] sm:$0xf]
    %v56 = vld [vmem:[#allocation2 + $0x60] sm:$0xf]
    %v82 = vunpack.c.l.b16 %v32
    %v83 = vunpack.c.l.b16 %v33
    %v84 = vunpack.c.l.b16 %v34
    %v85 = vunpack.c.l.b16 %v35
    %v86 = vunpack.c.l.b16 %v36
    %v87 = vunpack.c.l.b16 %v37
    %v88 = vunpack.c.l.b16 %v38
    %v89 = vunpack.c.l.b16 %v39
    %v90 = vunpack.c.l.b16 %v40
    %v91 = vunpack.c.l.b16 %v41
    %v92 = vunpack.c.l.b16 %v42
    %v93 = vunpack.c.l.b16 %v43
    %v94 = vunpack.c.l.b16 %v44
    %v95 = vunpack.c.l.b16 %v45
    %v96 = vunpack.c.l.b16 %v46
    %v97 = vunpack.c.l.b16 %v47
    %v98 = vunpack.c.l.b16 %v48
    %v99 = vunpack.c.l.b16 %v49
    %v100 = vunpack.c.l.b16 %v50
    %v101 = vunpack.c.l.b16 %v51
    %v102 = vunpack.c.l.b16 %v52
    %v103 = vunpack.c.l.b16 %v53
    %v104 = vunpack.c.l.b16 %v54
    %v105 = vunpack.c.l.b16 %v55
    %v106 = vunpack.c.l.b16 %v56
    %v107 = vpack.c.b16 %v83, %v82
    %v108 = vpack.c.b16 %v85, %v84
    %v109 = vpack.c.b16 %v87, %v86
    %v110 = vpack.c.b16 %v89, %v88
    %v111 = vpack.c.b16 %v91, %v90
    %v112 = vpack.c.b16 %v93, %v92
    %v113 = vpack.c.b16 %v95, %v94
    %v114 = vpack.c.b16 %v97, %v96
    %v115 = vpack.c.b16 %v99, %v98
    %v116 = vpack.c.b16 %v101, %v100
    %v117 = vpack.c.b16 %v103, %v102
    %v118 = vpack.c.b16 %v105, %v104
    %v119 = vpack.c.b16 %v106, %v106
    %vm132 = vcmask 588800
    %v134 = vsel %vm132, %v31, 0
    %vm136 = vcmask 1043456
    %v138 = vsel %vm136, %v119, 0
    %140 = vmatprep.subr.bf16.mxu0 0
    %141 = vmatpush1.bf16.msra.mxu0 %v107
    %142 = vmatprep.subr.bf16.mxu0 0
    %143 = vmatpush1.bf16.msra.mxu0 %v108
    %144 = vmatprep.subr.bf16.mxu0 0
    %145 = vmatpush1.bf16.msra.mxu0 %v109
    %146 = vmatprep.subr.bf16.mxu0 0
    %147 = vmatpush1.bf16.msra.mxu0 %v110
    %148 = vmatprep.subr.bf16.mxu0 0
    %149 = vmatpush1.bf16.msra.mxu0 %v111
    %150 = vmatprep.subr.bf16.mxu0 0
    %151 = vmatpush1.bf16.msra.mxu0 %v112
    %152 = vmatprep.subr.bf16.mxu0 0
    %153 = vmatpush1.bf16.msra.mxu0 %v113
    %154 = vmatprep.subr.bf16.mxu0 0
    %155 = vmatpush1.bf16.msra.mxu0 %v114
    %156 = vmatprep.subr.bf16.mxu0 0
    %157 = vmatpush1.bf16.msra.mxu0 %v115
    %158 = vmatprep.subr.bf16.mxu0 0
    %159 = vmatpush1.bf16.msra.mxu0 %v116
    %160 = vmatprep.subr.bf16.mxu0 0
    %161 = vmatpush1.bf16.msra.mxu0 %v117
    %162 = vmatprep.subr.bf16.mxu0 0
    %163 = vmatpush1.bf16.msra.mxu0 %v118
    %164 = vmatprep.subr.bf16.mxu0 0
    %165 = vmatpush1.bf16.msra.mxu0 %v138
    %166 = vmatprep.subr.bf16.mxu0 0
    %167 = vmatpush1.bf16.msra.mxu0 0
    %168 = vmatprep.subr.bf16.mxu0 0
    %169 = vmatpush1.bf16.msra.mxu0 0
    %170 = vmatprep.subr.bf16.mxu0 0
    %171 = vmatpush1.bf16.msra.mxu0 0
    %172 = vmatprep.mubr.bf16.mxu0 %v134
    %173 = vmatmul.mubr.bf16.gmra.mrb[0].mxu0 %v30
    %v174 = vpop.f32.mrb[0].mxu0
    %v175 = vadd.f32 0.0, %v174
    %v176 = vpop.f32.mrb[0].mxu0
    %v177 = vpop.f32.mrb[0].mxu0
    %v178 = vpop.f32.mrb[0].mxu0
    %179 = vdwg.mxu0
    %v180 = vpack.c.bf16 %v175, %v175
    %181 = vst [vmem:[%s2] sm:$0xf] %v180
    %v182 = vrot.slane %v175, 4
    %v183 = vadd.f32 %v175, %v182
    %v184 = vrot.slane %v183, 2
    %v185 = vadd.f32 %v183, %v184
    %v186 = vrot.slane %v185, 1
    %v187 = vadd.f32 %v185, %v186
    %188 = vst [vmem:[%s3] sm:$0x1] %v187
    %v189 = vmul.f32 %v175, %v175
    %v190 = vrot.slane %v189, 4
    %v191 = vadd.f32 %v189, %v190
    %v192 = vrot.slane %v191, 2
    %v193 = vadd.f32 %v191, %v192
    %v194 = vrot.slane %v193, 1
    %v195 = vadd.f32 %v193, %v194
    %196 = vst [vmem:[%s3 + $0x1] sm:$0x1] %v195
    // Predicated region
    $region14: #{hourglass_forward.2} parent=1 // pred_check
      _
    $region15: #{hourglass_forward.2} parent=1 // pred_check_branch
      %198 = sbr.rel (0) target = $region17
    $region16: #{hourglass_forward.2} parent=1 // pred_region
      _
    $region17: #{hourglass_forward.2} parent=1 // pred_fallthru
      _
    // Predicated region
    $region18: #{hourglass_forward.2} parent=1 // pred_check
      _
    $region19: #{hourglass_forward.2} parent=1 // pred_check_branch
      %200 = sbr.rel (0) target = $region21
    $region20: #{hourglass_forward.2} parent=1 // pred_region
      _
    $region21: #{hourglass_forward.2} parent=1 // pred_fallthru
      _
    // Predicated region
    $region22: #{hourglass_forward.2} parent=1 // pred_check
      _
    $region23: #{hourglass_forward.2} parent=1 // pred_check_branch
      %202 = sbr.rel (0) target = $region25
    $region24: #{hourglass_forward.2} parent=1 // pred_region
      _
    $region25: #{hourglass_forward.2} parent=1 // pred_fallthru
      _
    // Predicated region
    $region26: #{hourglass_forward.2} parent=1 // pred_check
      _
    $region27: #{hourglass_forward.2} parent=1 // pred_check_branch
      %204 = sbr.rel (0) target = $region29
    $region28: #{hourglass_forward.2} parent=1 // pred_region
      _
    $region29: #{hourglass_forward.2} parent=1 // pred_fallthru
      _
    %205 = vsyncpa [#allocation3], 1

// kernel: hourglass_forward.3
$region0: #{hourglass_forward.3}
  #allocation0 [shape = 'u32[]', space=smem, size = 0x4, offset = 0x4, fixed_abs, tag = 'smem constant byte address 0x4 - core index']
  #allocation1 [shape = 'u32[144,128]{1,0:T(1,128)}', space=vmem, size = 0x12000, scoped, tag = 'internal scratch']
  %s0 = inlined_call_operand.vmem [shape: bf16[8,128], index: 0, kind: input, shape index: {}]
  %s1 = inlined_call_operand.vmem [shape: f32[2,128], index: 1, kind: input, shape index: {}]
  %s2 = inlined_call_operand.vmem [shape: bf16[128,32], index: 2, kind: input, shape index: {}]
  %s3 = inlined_call_operand.vmem [shape: bf16[32,128], index: 3, kind: input, shape index: {}]
  %s4 = inlined_call_operand.vmem [shape: bf16[128,200], index: 4, kind: input, shape index: {}]
  %s5 = inlined_call_operand.vmem [shape: f32[3,200], index: 5, kind: input, shape index: {}]
  %s6 = inlined_call_operand.vmem [shape: f32[8,200], index: 6, kind: output, shape index: {}]
  %s7 = sld [smem:[#allocation0]]
  $region34: #{hourglass_forward.3} parent=0
    _
  %s9 = ssub.s32 1, %s7
  %s10 = scalar_select 0, %s9, %s7
  // Predicated region
  $region2: #{hourglass_forward.3} parent=0 // pred_check
    _
  $region3: #{hourglass_forward.3} parent=0 // pred_check_branch
    %12 = sbr.rel (0) target = $region5
  $region4: #{hourglass_forward.3} parent=0 // pred_region
    _
  $region5: #{hourglass_forward.3} parent=0 // pred_fallthru
    _
  // Predicated region
  $region6: #{hourglass_forward.3} parent=0 // pred_check
    _
  $region7: #{hourglass_forward.3} parent=0 // pred_check_branch
    %14 = sbr.rel (0) target = $region9
  $region8: #{hourglass_forward.3} parent=0 // pred_region
    _
  $region9: #{hourglass_forward.3} parent=0 // pred_fallthru
    _
  // Predicated region
  $region10: #{hourglass_forward.3} parent=0 // pred_check
    _
  $region11: #{hourglass_forward.3} parent=0 // pred_check_branch
    %16 = sbr.rel (0) target = $region13
  $region12: #{hourglass_forward.3} parent=0 // pred_region
    _
  $region13: #{hourglass_forward.3} parent=0 // pred_fallthru
    _
  // Predicated region
  $region14: #{hourglass_forward.3} parent=0 // pred_check
    _
  $region15: #{hourglass_forward.3} parent=0 // pred_check_branch
    %18 = sbr.rel (0) target = $region17
  $region16: #{hourglass_forward.3} parent=0 // pred_region
    _
  $region17: #{hourglass_forward.3} parent=0 // pred_fallthru
    _
  // Predicated region
  $region18: #{hourglass_forward.3} parent=0 // pred_check
    _
  $region19: #{hourglass_forward.3} parent=0 // pred_check_branch
    %20 = sbr.rel (0) target = $region21
  $region20: #{hourglass_forward.3} parent=0 // pred_region
    _
  $region21: #{hourglass_forward.3} parent=0 // pred_fallthru
    _
  // Predicated region
  $region22: #{hourglass_forward.3} parent=0 // pred_check
    _
  $region23: #{hourglass_forward.3} parent=0 // pred_check_branch
    %22 = sbr.rel (0) target = $region25
  $region24: #{hourglass_forward.3} parent=0 // pred_region
    _
  $region25: #{hourglass_forward.3} parent=0 // pred_fallthru
    _
  %v24 = vld [vmem:[%s0] sm:$0xf]
  %v25 = vunpack.c.l.bf16 %v24
  %v26 = vld [vmem:[%s1] sm:$0x1]
  %v27 = vlaneseq
  %v28 = vshrl.u32 %v27, 7
  %v29 = vsub.s32 0, %v28
  %v30 = vrot.slane %v26, %v29
  %v31 = vmul.f32 %v25, %v30
  %v32 = vld [vmem:[%s1 + $0x1] sm:$0x1]
  %v33 = vlaneseq
  %v34 = vshrl.u32 %v33, 7
  %v35 = vsub.s32 0, %v34
  %v36 = vrot.slane %v32, %v35
  %v37 = vadd.f32 %v31, %v36
  %v38 = vmax.f32 %v37, 0.0
  %v39 = vpack.c.bf16 %v38, %v38
  %v40 = vld [vmem:[%s2] sm:$0xf]
  %v41 = vld [vmem:[%s2 + $0x4] sm:$0xf]
  %v42 = vld [vmem:[%s2 + $0x8] sm:$0xf]
  %v43 = vld [vmem:[%s2 + $0xc] sm:$0xf]
  %v44 = vld [vmem:[%s2 + $0x10] sm:$0xf]
  %v45 = vld [vmem:[%s2 + $0x14] sm:$0xf]
  %v46 = vld [vmem:[%s2 + $0x18] sm:$0xf]
  %v47 = vld [vmem:[%s2 + $0x1c] sm:$0xf]
  %v48 = vld [vmem:[%s2 + $0x20] sm:$0xf]
  %v49 = vld [vmem:[%s2 + $0x24] sm:$0xf]
  %v50 = vld [vmem:[%s2 + $0x28] sm:$0xf]
  %v51 = vld [vmem:[%s2 + $0x2c] sm:$0xf]
  %v52 = vld [vmem:[%s2 + $0x30] sm:$0xf]
  %v53 = vld [vmem:[%s2 + $0x34] sm:$0xf]
  %v54 = vld [vmem:[%s2 + $0x38] sm:$0xf]
  %v55 = vld [vmem:[%s2 + $0x3c] sm:$0xf]
  %v56 = vld [vmem:[%s5] sm:$0x1]
  %v57 = vlaneseq
  %v58 = vshrl.u32 %v57, 7
  %v59 = vsub.s32 0, %v58
  %v60 = vrot.slane %v56, %v59
  %v77 = vunpack.c.l.b16 %v40
  %v78 = vunpack.c.l.b16 %v41
  %v79 = vunpack.c.l.b16 %v42
  %v80 = vunpack.c.l.b16 %v43
  %v81 = vunpack.c.l.b16 %v44
  %v82 = vunpack.c.l.b16 %v45
  %v83 = vunpack.c.l.b16 %v46
  %v84 = vunpack.c.l.b16 %v47
  %v85 = vunpack.c.l.b16 %v48
  %v86 = vunpack.c.l.b16 %v49
  %v87 = vunpack.c.l.b16 %v50
  %v88 = vunpack.c.l.b16 %v51
  %v89 = vunpack.c.l.b16 %v52
  %v90 = vunpack.c.l.b16 %v53
  %v91 = vunpack.c.l.b16 %v54
  %v92 = vunpack.c.l.b16 %v55
  %v93 = vpack.c.b16 %v78, %v77
  %v94 = vpack.c.b16 %v80, %v79
  %v95 = vpack.c.b16 %v82, %v81
  %v96 = vpack.c.b16 %v84, %v83
  %v97 = vpack.c.b16 %v86, %v85
  %v98 = vpack.c.b16 %v88, %v87
  %v99 = vpack.c.b16 %v90, %v89
  %v100 = vpack.c.b16 %v92, %v91
  %109 = vmatprep.subr.bf16.mxu0 0
  %110 = vmatpush1.bf16.msra.mxu0 %v93
  %111 = vmatprep.subr.bf16.mxu0 0
  %112 = vmatpush1.bf16.msra.mxu0 %v94
  %113 = vmatprep.subr.bf16.mxu0 0
  %114 = vmatpush1.bf16.msra.mxu0 %v95
  %115 = vmatprep.subr.bf16.mxu0 0
  %116 = vmatpush1.bf16.msra.mxu0 %v96
  %117 = vmatprep.subr.bf16.mxu0 0
  %118 = vmatpush1.bf16.msra.mxu0 %v97
  %119 = vmatprep.subr.bf16.mxu0 0
  %120 = vmatpush1.bf16.msra.mxu0 %v98
  %121 = vmatprep.subr.bf16.mxu0 0
  %122 = vmatpush1.bf16.msra.mxu0 %v99
  %123 = vmatprep.subr.bf16.mxu0 0
  %124 = vmatpush1.bf16.msra.mxu0 %v100
  %125 = vmatprep.subr.bf16.mxu0 0
  %126 = vmatpush1.bf16.msra.mxu0 0
  %127 = vmatprep.subr.bf16.mxu0 0
  %128 = vmatpush1.bf16.msra.mxu0 0
  %129 = vmatprep.subr.bf16.mxu0 0
  %130 = vmatpush1.bf16.msra.mxu0 0
  %131 = vmatprep.subr.bf16.mxu0 0
  %132 = vmatpush1.bf16.msra.mxu0 0
  %133 = vmatprep.subr.bf16.mxu0 0
  %134 = vmatpush1.bf16.msra.mxu0 0
  %135 = vmatprep.subr.bf16.mxu0 0
  %136 = vmatpush1.bf16.msra.mxu0 0
  %137 = vmatprep.subr.bf16.mxu0 0
  %138 = vmatpush1.bf16.msra.mxu0 0
  %139 = vmatprep.subr.bf16.mxu0 0
  %140 = vmatpush1.bf16.msra.mxu0 0
  %141 = vmatprep.mubr.bf16.mxu0 0
  %142 = vmatmul.mubr.bf16.gmra.mrb[0].mxu0 %v39
  %v143 = vpop.f32.mrb[0].mxu0
  %v144 = vadd.f32 %v60, %v143
  %v145 = vpop.f32.mrb[0].mxu0
  %v146 = vpop.f32.mrb[0].mxu0
  %v147 = vpop.f32.mrb[0].mxu0
  %148 = vdwg.mxu0
  %v149 = vmax.f32 %v144, 0.0
  %v150 = vpack.c.bf16 %v149, %v149
  %v151 = vld [vmem:[%s3] sm:$0xf]
  %v152 = vld [vmem:[%s3 + $0x4] sm:$0xf]
  %v153 = vld [vmem:[%s3 + $0x8] sm:$0xf]
  %v154 = vld [vmem:[%s3 + $0xc] sm:$0xf]
  %v155 = vld [vmem:[%s5 + $0x1] sm:$0x1]
  %v156 = vlaneseq
  %v157 = vshrl.u32 %v156, 7
  %v158 = vsub.s32 0, %v157
  %v159 = vrot.slane %v155, %v158
  %v164 = vunpack.c.l.b16 %v151
  %v165 = vunpack.c.l.b16 %v152
  %v166 = vunpack.c.l.b16 %v153
  %v167 = vunpack.c.l.b16 %v154
  %v168 = vpack.c.b16 %v165, %v164
  %v169 = vpack.c.b16 %v167, %v166
  %vm172 = vcmask 261120
  %v174 = vsel %vm172, %v150, 0
  %176 = vmatprep.subr.bf16.mxu0 0
  %177 = vmatpush1.bf16.msra.mxu0 %v168
  %178 = vmatprep.subr.bf16.mxu0 0
  %179 = vmatpush1.bf16.msra.mxu0 %v169
  %180 = vmatprep.subr.bf16.mxu0 0
  %181 = vmatpush1.bf16.msra.mxu0 0
  %182 = vmatprep.subr.bf16.mxu0 0
  %183 = vmatpush1.bf16.msra.mxu0 0
  %184 = vmatprep.subr.bf16.mxu0 0
  %185 = vmatpush1.bf16.msra.mxu0 0
  %186 = vmatprep.subr.bf16.mxu0 0
  %187 = vmatpush1.bf16.msra.mxu0 0
  %188 = vmatprep.subr.bf16.mxu0 0
  %189 = vmatpush1.bf16.msra.mxu0 0
  %190 = vmatprep.subr.bf16.mxu0 0
  %191 = vmatpush1.bf16.msra.mxu0 0
  %192 = vmatprep.subr.bf16.mxu0 0
  %193 = vmatpush1.bf16.msra.mxu0 0
  %194 = vmatprep.subr.bf16.mxu0 0
  %195 = vmatpush1.bf16.msra.mxu0 0
  %196 = vmatprep.subr.bf16.mxu0 0
  %197 = vmatpush1.bf16.msra.mxu0 0
  %198 = vmatprep.subr.bf16.mxu0 0
  %199 = vmatpush1.bf16.msra.mxu0 0
  %200 = vmatprep.subr.bf16.mxu0 0
  %201 = vmatpush1.bf16.msra.mxu0 0
  %202 = vmatprep.subr.bf16.mxu0 0
  %203 = vmatpush1.bf16.msra.mxu0 0
  %204 = vmatprep.subr.bf16.mxu0 0
  %205 = vmatpush1.bf16.msra.mxu0 0
  %206 = vmatprep.subr.bf16.mxu0 0
  %207 = vmatpush1.bf16.msra.mxu0 0
  %208 = vmatprep.mubr.bf16.mxu0 0
  %209 = vmatmul.mubr.bf16.gmra.mrb[0].mxu0 %v174
  %v210 = vpop.f32.mrb[0].mxu0
  %v211 = vadd.f32 %v159, %v210
  %v212 = vpop.f32.mrb[0].mxu0
  %v213 = vpop.f32.mrb[0].mxu0
  %v214 = vpop.f32.mrb[0].mxu0
  %215 = vdwg.mxu0
  %v216 = vmax.f32 %v211, 0.0
  %v217 = vpack.c.bf16 %v216, %v216
  %v218 = vld [vmem:[%s4] sm:$0xff]
  %v219 = vld [vmem:[%s4 + $0x8] sm:$0xff]
  %v220 = vld [vmem:[%s4 + $0x10] sm:$0xff]
  %v221 = vld [vmem:[%s4 + $0x18] sm:$0xff]
  %v222 = vld [vmem:[%s4 + $0x20] sm:$0xff]
  %v223 = vld [vmem:[%s4 + $0x28] sm:$0xff]
  %v224 = vld [vmem:[%s4 + $0x30] sm:$0xff]
  %v225 = vld [vmem:[%s4 + $0x38] sm:$0xff]
  %v226 = vld [vmem:[%s4 + $0x40] sm:$0xff]
  %v227 = vld [vmem:[%s4 + $0x48] sm:$0xff]
  %v228 = vld [vmem:[%s4 + $0x50] sm:$0xff]
  %v229 = vld [vmem:[%s4 + $0x58] sm:$0xff]
  %v230 = vld [vmem:[%s4 + $0x60] sm:$0xff]
  %v231 = vld [vmem:[%s4 + $0x68] sm:$0xff]
  %v232 = vld [vmem:[%s4 + $0x70] sm:$0xff]
  %v233 = vld [vmem:[%s4 + $0x78] sm:$0xff]
  %s234 = scalar_lea.vmem %s5, 2
  %v235 = vld [vmem:[%s234] ss:$4 sm:$0x3]
  %v237 = vlaneseq
  %v238 = vshrl.u32 %v237, 7
  %v239 = vsub.s32 0, %v238
  %v240 = vrot.slane %v235, %v239
  %v241 = vlaneseq
  %v242 = vshrl.u32 %v241, 7
  %v243 = vsub.s32 1, %v242
  %v244 = vrot.slane %v235, %v243
  %v263 = vunpack.c.l.b16 %v218
  %v264 = vunpack.c.h.b16 %v218
  %v265 = vunpack.c.l.b16 %v219
  %v266 = vunpack.c.h.b16 %v219
  %v267 = vunpack.c.l.b16 %v220
  %v268 = vunpack.c.h.b16 %v220
  %v269 = vunpack.c.l.b16 %v221
  %v270 = vunpack.c.h.b16 %v221
  %v271 = vunpack.c.l.b16 %v222
  %v272 = vunpack.c.h.b16 %v222
  %v273 = vunpack.c.l.b16 %v223
  %v274 = vunpack.c.h.b16 %v223
  %v275 = vunpack.c.l.b16 %v224
  %v276 = vunpack.c.h.b16 %v224
  %v277 = vunpack.c.l.b16 %v225
  %v278 = vunpack.c.h.b16 %v225
  %v279 = vunpack.c.l.b16 %v226
  %v280 = vunpack.c.h.b16 %v226
  %v281 = vunpack.c.l.b16 %v227
  %v282 = vunpack.c.h.b16 %v227
  %v283 = vunpack.c.l.b16 %v228
  %v284 = vunpack.c.h.b16 %v228
  %v285 = vunpack.c.l.b16 %v229
  %v286 = vunpack.c.h.b16 %v229
  %v287 = vunpack.c.l.b16 %v230
  %v288 = vunpack.c.h.b16 %v230
  %v289 = vunpack.c.l.b16 %v231
  %v290 = vunpack.c.h.b16 %v231
  %v291 = vunpack.c.l.b16 %v232
  %v292 = vunpack.c.h.b16 %v232
  %v293 = vunpack.c.l.b16 %v233
  %v294 = vunpack.c.h.b16 %v233
  %v295 = vpack.c.b16 %v265, %v263
  %v296 = vpack.c.b16 %v266, %v264
  %v297 = vpack.c.b16 %v269, %v267
  %v298 = vpack.c.b16 %v270, %v268
  %v299 = vpack.c.b16 %v273, %v271
  %v300 = vpack.c.b16 %v274, %v272
  %v301 = vpack.c.b16 %v277, %v275
  %v302 = vpack.c.b16 %v278, %v276
  %v303 = vpack.c.b16 %v281, %v279
  %v304 = vpack.c.b16 %v282, %v280
  %v305 = vpack.c.b16 %v285, %v283
  %v306 = vpack.c.b16 %v286, %v284
  %v307 = vpack.c.b16 %v289, %v287
  %v308 = vpack.c.b16 %v290, %v288
  %v309 = vpack.c.b16 %v293, %v291
  %v310 = vpack.c.b16 %v294, %v292
  %327 = vmatprep.subr.bf16.mxu0 %v296
  %328 = vmatpush1.bf16.msra.mxu0 %v295
  %329 = vmatprep.subr.bf16.mxu0 %v298
  %330 = vmatpush1.bf16.msra.mxu0 %v297
  %331 = vmatprep.subr.bf16.mxu0 %v300
  %332 = vmatpush1.bf16.msra.mxu0 %v299
  %333 = vmatprep.subr.bf16.mxu0 %v302
  %334 = vmatpush1.bf16.msra.mxu0 %v301
  %335 = vmatprep.subr.bf16.mxu0 %v304
  %336 = vmatpush1.bf16.msra.mxu0 %v303
  %337 = vmatprep.subr.bf16.mxu0 %v306
  %338 = vmatpush1.bf16.msra.mxu0 %v305
  %339 = vmatprep.subr.bf16.mxu0 %v308
  %340 = vmatpush1.bf16.msra.mxu0 %v307
  %341 = vmatprep.subr.bf16.mxu0 %v310
  %342 = vmatpush1.bf16.msra.mxu0 %v309
  %343 = vmatprep.subr.bf16.mxu0 0
  %344 = vmatpush1.bf16.msra.mxu0 0
  %345 = vmatprep.subr.bf16.mxu0 0
  %346 = vmatpush1.bf16.msra.mxu0 0
  %347 = vmatprep.subr.bf16.mxu0 0
  %348 = vmatpush1.bf16.msra.mxu0 0
  %349 = vmatprep.subr.bf16.mxu0 0
  %350 = vmatpush1.bf16.msra.mxu0 0
  %351 = vmatprep.subr.bf16.mxu0 0
  %352 = vmatpush1.bf16.msra.mxu0 0
  %353 = vmatprep.subr.bf16.mxu0 0
  %354 = vmatpush1.bf16.msra.mxu0 0
  %355 = vmatprep.subr.bf16.mxu0 0
  %356 = vmatpush1.bf16.msra.mxu0 0
  %357 = vmatprep.subr.bf16.mxu0 0
  %358 = vmatpush1.bf16.msra.mxu0 0
  %359 = vmatprep.mubr.bf16.mxu0 0
  %360 = vmatmul.mubr.bf16.gmra.mrb[0].mxu0 %v217
  %v361 = vpop.f32.mrb[0].mxu0
  %v362 = vadd.f32 %v240, %v361
  %v363 = vpop.f32.mrb[0].mxu0
  %v364 = vadd.f32 %v244, %v363
  %v365 = vpop.f32.mrb[0].mxu0
  %v366 = vpop.f32.mrb[0].mxu0
  %367 = vdwg.mxu0
  %v368 = vmul.f32 %v362, 0.5
  %v369 = vmul.f32 %v364, 0.5
  %v370 = vtanh.pop %v368
  %v371 = vtanh.pop %v369
  %v372 = vadd.f32 %v370, 1.0
  %v373 = vadd.f32 %v371, 1.0
  %v374 = vmul.f32 %v372, 0.5
  %v375 = vmul.f32 %v373, 0.5
  %376 = vst [vmem:[%s6] sm:$0xff] %v374
  %vm377 = vcmask 588800
  %378 = vst.msk [vmem:[%s6 + $0x8] sm:$0xff] %vm377, %v375
  // Predicated region
  $region26: #{hourglass_forward.3} parent=0 // pred_check
    _
  $region27: #{hourglass_forward.3} parent=0 // pred_check_branch
    %380 = sbr.rel (0) target = $region29
  $region28: #{hourglass_forward.3} parent=0 // pred_region
    _
  $region29: #{hourglass_forward.3} parent=0 // pred_fallthru
    _
  // Predicated region
  $region30: #{hourglass_forward.3} parent=0 // pred_check
    _
  $region31: #{hourglass_forward.3} parent=0 // pred_check_branch
    %382 = sbr.rel (0) target = $region33
  $region32: #{hourglass_forward.3} parent=0 // pred_region
    _
  $region33: #{hourglass_forward.3} parent=0 // pred_fallthru
    _

</llo_original>
